<compile_context>
chip_gen: v6e
topology: v6e:2x2x1
jax: 0.10.0
libtpu: 0.0.40
codegen_flags: <defaults>
</compile_context>

<pallas_src>
import jax
import jax.numpy as jnp
from jax import lax
from jax.experimental import pallas as pl
from jax.experimental.pallas import tpu as pltpu

INPUT_SIZE = 1
HIDDEN_SIZE = 30
OUTPUT_SIZE = 1

# Packed parameter slab row indices.
_ROW_H0 = 0       # initial hidden state            (1, H)
_ROW_WIH = 1      # W_ih^T (input_size == 1)        (1, H)
_ROW_B = 2        # b_ih + b_hh                     (1, H)
_ROW_WLIN = 3     # W_lin (output_size == 1)        (1, H)
_ROW_BLIN = 4     # b_lin broadcast across the row  (1, H)
_SLAB_ROWS = 5


def rnn_linear_kernel(x_ref, whh_t_ref, slab_ref, out_ref, hfin_ref, hstates):
    """Single-invocation kernel: full sequence recurrence + linear head.

    x_ref:     (seq, 1)       input sequence (INPUT_SIZE == 1)
    whh_t_ref: (H, H)         W_hh^T
    slab_ref:  (5, H)         packed small params (see _ROW_* above)
    out_ref:   (seq, 1)       head output
    hfin_ref:  (1, H)         final hidden state
    hstates:   VMEM (seq, H)  scratch: input projection, overwritten with hidden states
    """
    seq = x_ref.shape[0]
    whh_t = whh_t_ref[...]

    h0 = slab_ref[_ROW_H0:_ROW_H0 + 1, :]
    wih_row = slab_ref[_ROW_WIH:_ROW_WIH + 1, :]
    b = slab_ref[_ROW_B:_ROW_B + 1, :]
    wlin_row = slab_ref[_ROW_WLIN:_ROW_WLIN + 1, :]
    blin = slab_ref[_ROW_BLIN:_ROW_BLIN + 1, 0:1]          # (1, 1)

    # Hoisted input projection for every timestep at once (pure VPU broadcast
    # multiply/add); written straight into hstates and overwritten per step.
    hstates[...] = x_ref[...] * wih_row + b

    def step(t, h):
        pre_t = hstates[pl.ds(t, 1), :]                     # (1, H)
        h_new = jnp.tanh(
            pre_t + jnp.dot(h, whh_t, preferred_element_type=jnp.float32))
        hstates[pl.ds(t, 1), :] = h_new
        return h_new

    # Serial recurrence; unroll capped at 8 to bound code size / vreg pressure.
    h_final = lax.fori_loop(0, seq, step, h0, unroll=8)
    hfin_ref[...] = h_final

    # Head: out_t = <hstates[t, :], W_lin> + b_lin.  OUTPUT_SIZE == 1 so this is a
    # broadcast multiply + cross-lane reduce instead of an MXU matmul.
    out_ref[...] = (jnp.sum(hstates[...] * wlin_row, axis=-1, keepdims=True)
                    + blin)


def net_forward(x, hidden_prev, params):
    """Mirrors Net.forward for batch=1.

    x:           (1, seq, INPUT_SIZE)  float32
    hidden_prev: (1, 1, HIDDEN_SIZE)   float32
    returns (out, hidden_new): out (1, seq, OUTPUT_SIZE), hidden_new (1, 1, HIDDEN_SIZE)
    """
    assert x.shape[0] == 1, "module uses hidden_prev of shape (1, 1, H) -> batch = 1"
    seq = x.shape[1]

    x_flat = x.reshape(seq, INPUT_SIZE).astype(jnp.float32)
    whh_t = params["w_hh"].T.astype(jnp.float32)                     # (H, H)

    # Pack all the tiny parameters into one (5, H) slab -> one DMA instead of five.
    h0_row = hidden_prev.reshape(1, HIDDEN_SIZE).astype(jnp.float32)
    wih_row = params["w_ih"].reshape(1, HIDDEN_SIZE).astype(jnp.float32)   # W_ih^T
    b_row = (params["b_ih"] + params["b_hh"]).reshape(1, HIDDEN_SIZE).astype(jnp.float32)
    wlin_row = params["w_lin"].reshape(1, HIDDEN_SIZE).astype(jnp.float32)  # W_lin
    blin_row = jnp.broadcast_to(
        params["b_lin"].reshape(1, 1).astype(jnp.float32), (1, HIDDEN_SIZE))
    slab = jnp.concatenate([h0_row, wih_row, b_row, wlin_row, blin_row], axis=0)

    def vmem_spec():
        return pl.BlockSpec(memory_space=pltpu.MemorySpace.VMEM)

    out_flat, h_final = pl.pallas_call(
        rnn_linear_kernel,
        out_shape=(
            jax.ShapeDtypeStruct((seq, OUTPUT_SIZE), jnp.float32),
            jax.ShapeDtypeStruct((1, HIDDEN_SIZE), jnp.float32),
        ),
        in_specs=[vmem_spec(), vmem_spec(), vmem_spec()],
        out_specs=(vmem_spec(), vmem_spec()),
        scratch_shapes=[pltpu.VMEM((seq, HIDDEN_SIZE), jnp.float32)],
    )(x_flat, whh_t, slab)

    out = out_flat[None, :, :]            # unsqueeze(dim=0) -> (1, seq, 1)
    hidden_new = h_final[None, :, :]      # (1, 1, hidden)
    return out, hidden_new


def init_params(key):
    """Deterministic parameter init matching nn.RNN / nn.Linear shapes."""
    ks = jax.random.split(key, 6)
    scale = 1.0 / jnp.sqrt(HIDDEN_SIZE)
    u = lambda k, shape: jax.random.uniform(
        k, shape, minval=-scale, maxval=scale, dtype=jnp.float32)
    return {
        "w_ih": u(ks[0], (HIDDEN_SIZE, INPUT_SIZE)),
        "w_hh": u(ks[1], (HIDDEN_SIZE, HIDDEN_SIZE)),
        "b_ih": u(ks[2], (HIDDEN_SIZE,)),
        "b_hh": u(ks[3], (HIDDEN_SIZE,)),
        "w_lin": u(ks[4], (OUTPUT_SIZE, HIDDEN_SIZE)),
        "b_lin": u(ks[5], (OUTPUT_SIZE,)),
    }


def reference_forward(x, hidden_prev, params):
    """Pure-JAX reference mirroring the PyTorch module semantics."""
    seq = x.shape[1]
    h = hidden_prev.reshape(1, HIDDEN_SIZE)
    hs = []
    for t in range(seq):
        x_t = x[:, t, :]                                     # (1, input)
        h = jnp.tanh(x_t @ params["w_ih"].T + params["b_ih"]
                     + h @ params["w_hh"].T + params["b_hh"])
        hs.append(h)
    H = jnp.concatenate(hs, axis=0)                          # (seq, hidden)
    out = H @ params["w_lin"].T + params["b_lin"]            # (seq, 1)
    return out[None, :, :], h[None, :, :]


if __name__ == "__main__":
    key = jax.random.PRNGKey(0)
    k_params, k_x = jax.random.split(key)

    params = init_params(k_params)

    seq = 8
    x = jax.random.normal(k_x, (1, seq, INPUT_SIZE), dtype=jnp.float32)
    hidden_prev = jnp.zeros((1, 1, HIDDEN_SIZE), dtype=jnp.float32)

    out, hidden_new = net_forward(x, hidden_prev, params)
    out = jax.block_until_ready(out)
    hidden_new = jax.block_until_ready(hidden_new)

    ref_out, ref_h = reference_forward(x, hidden_prev, params)
    assert out.shape == (1, seq, OUTPUT_SIZE)
    assert hidden_new.shape == (1, 1, HIDDEN_SIZE)
    assert jnp.allclose(out, ref_out, atol=1e-4, rtol=1e-4)
    assert jnp.allclose(hidden_new, ref_h, atol=1e-4, rtol=1e-4)

    print("KERNEL_OK")
</pallas_src>

<mosaic_0001>
module attributes {stable_mosaic.version = 11 : i64} {
  func.func @rnn_linear_kernel(%arg0: memref<8x1xf32, #tpu.memory_space<vmem>>, %arg1: memref<30x30xf32, #tpu.memory_space<vmem>>, %arg2: memref<5x30xf32, #tpu.memory_space<vmem>>, %arg3: memref<8x1xf32, #tpu.memory_space<vmem>>, %arg4: memref<1x30xf32, #tpu.memory_space<vmem>>, %arg5: memref<8x30xf32, #tpu.memory_space<vmem>>) attributes {dimension_semantics = [], scalar_prefetch = 0 : i64, scratch_operands = 1 : i64, tpu.core_type = #tpu.core_type<tc>} {
    %c0 = arith.constant 0 : index
    %c0_0 = arith.constant 0 : index
    %0 = vector.load %arg1[%c0, %c0_0] : memref<30x30xf32, #tpu.memory_space<vmem>>, vector<30x30xf32>
    %c0_1 = arith.constant 0 : index
    %c0_2 = arith.constant 0 : index
    %1 = vector.load %arg2[%c0_1, %c0_2] : memref<5x30xf32, #tpu.memory_space<vmem>>, vector<1x30xf32>
    %c1 = arith.constant 1 : index
    %c0_3 = arith.constant 0 : index
    %2 = vector.load %arg2[%c1, %c0_3] : memref<5x30xf32, #tpu.memory_space<vmem>>, vector<1x30xf32>
    %c2 = arith.constant 2 : index
    %c0_4 = arith.constant 0 : index
    %3 = vector.load %arg2[%c2, %c0_4] : memref<5x30xf32, #tpu.memory_space<vmem>>, vector<1x30xf32>
    %c3 = arith.constant 3 : index
    %c0_5 = arith.constant 0 : index
    %4 = vector.load %arg2[%c3, %c0_5] : memref<5x30xf32, #tpu.memory_space<vmem>>, vector<1x30xf32>
    %c4 = arith.constant 4 : index
    %c0_6 = arith.constant 0 : index
    %5 = vector.load %arg2[%c4, %c0_6] : memref<5x30xf32, #tpu.memory_space<vmem>>, vector<1x1xf32>
    %c0_7 = arith.constant 0 : index
    %c0_8 = arith.constant 0 : index
    %6 = vector.load %arg0[%c0_7, %c0_8] : memref<8x1xf32, #tpu.memory_space<vmem>>, vector<8x1xf32>
    %7 = vector.broadcast %6 : vector<8x1xf32> to vector<8x30xf32>
    %8 = vector.broadcast %2 : vector<1x30xf32> to vector<8x30xf32>
    %9 = arith.mulf %7, %8 : vector<8x30xf32>
    %10 = vector.broadcast %3 : vector<1x30xf32> to vector<8x30xf32>
    %11 = arith.addf %9, %10 : vector<8x30xf32>
    %c0_9 = arith.constant 0 : index
    %c0_10 = arith.constant 0 : index
    %12 = vector.load %arg5[%c0_9, %c0_10] : memref<8x30xf32, #tpu.memory_space<vmem>>, vector<8x30xf32>
    tpu.vector_store %arg5[%c0_9, %c0_10], %11 {strides = array<i32>} : memref<8x30xf32, #tpu.memory_space<vmem>>, vector<8x30xf32>,
    %c0_i32 = arith.constant 0 : i32
    %13 = arith.index_cast %c0_i32 : i32 to index
    %c0_11 = arith.constant 0 : index
    %14 = vector.load %arg5[%13, %c0_11] : memref<8x30xf32, #tpu.memory_space<vmem>>, vector<1x30xf32>
    %cst = arith.constant dense<0.000000e+00> : vector<1x30xf32>
    %15 = tpu.matmul %1, %0, %cst {dimension_numbers = #tpu.dot_dimension_numbers<[1], [0], [0], [1], [0, 0, 1, 1], [], []>} : vector<1x30xf32>, vector<30x30xf32>, vector<1x30xf32> -> vector<1x30xf32>
    %16 = arith.addf %14, %15 : vector<1x30xf32>
    %17 = math.tanh %16 : vector<1x30xf32>
    %18 = arith.index_cast %c0_i32 : i32 to index
    %c0_12 = arith.constant 0 : index
    %19 = vector.load %arg5[%18, %c0_12] : memref<8x30xf32, #tpu.memory_space<vmem>>, vector<1x30xf32>
    tpu.vector_store %arg5[%18, %c0_12], %17 {strides = array<i32>} : memref<8x30xf32, #tpu.memory_space<vmem>>, vector<1x30xf32>,
    %c1_i32 = arith.constant 1 : i32
    %20 = arith.index_cast %c1_i32 : i32 to index
    %c0_13 = arith.constant 0 : index
    %21 = vector.load %arg5[%20, %c0_13] : memref<8x30xf32, #tpu.memory_space<vmem>>, vector<1x30xf32>
    %cst_14 = arith.constant dense<0.000000e+00> : vector<1x30xf32>
    %22 = tpu.matmul %17, %0, %cst_14 {dimension_numbers = #tpu.dot_dimension_numbers<[1], [0], [0], [1], [0, 0, 1, 1], [], []>} : vector<1x30xf32>, vector<30x30xf32>, vector<1x30xf32> -> vector<1x30xf32>
    %23 = arith.addf %21, %22 : vector<1x30xf32>
    %24 = math.tanh %23 : vector<1x30xf32>
    %25 = arith.index_cast %c1_i32 : i32 to index
    %c0_15 = arith.constant 0 : index
    %26 = vector.load %arg5[%25, %c0_15] : memref<8x30xf32, #tpu.memory_space<vmem>>, vector<1x30xf32>
    tpu.vector_store %arg5[%25, %c0_15], %24 {strides = array<i32>} : memref<8x30xf32, #tpu.memory_space<vmem>>, vector<1x30xf32>,
    %c2_i32 = arith.constant 2 : i32
    %27 = arith.index_cast %c2_i32 : i32 to index
    %c0_16 = arith.constant 0 : index
    %28 = vector.load %arg5[%27, %c0_16] : memref<8x30xf32, #tpu.memory_space<vmem>>, vector<1x30xf32>
    %cst_17 = arith.constant dense<0.000000e+00> : vector<1x30xf32>
    %29 = tpu.matmul %24, %0, %cst_17 {dimension_numbers = #tpu.dot_dimension_numbers<[1], [0], [0], [1], [0, 0, 1, 1], [], []>} : vector<1x30xf32>, vector<30x30xf32>, vector<1x30xf32> -> vector<1x30xf32>
    %30 = arith.addf %28, %29 : vector<1x30xf32>
    %31 = math.tanh %30 : vector<1x30xf32>
    %32 = arith.index_cast %c2_i32 : i32 to index
    %c0_18 = arith.constant 0 : index
    %33 = vector.load %arg5[%32, %c0_18] : memref<8x30xf32, #tpu.memory_space<vmem>>, vector<1x30xf32>
    tpu.vector_store %arg5[%32, %c0_18], %31 {strides = array<i32>} : memref<8x30xf32, #tpu.memory_space<vmem>>, vector<1x30xf32>,
    %c3_i32 = arith.constant 3 : i32
    %34 = arith.index_cast %c3_i32 : i32 to index
    %c0_19 = arith.constant 0 : index
    %35 = vector.load %arg5[%34, %c0_19] : memref<8x30xf32, #tpu.memory_space<vmem>>, vector<1x30xf32>
    %cst_20 = arith.constant dense<0.000000e+00> : vector<1x30xf32>
    %36 = tpu.matmul %31, %0, %cst_20 {dimension_numbers = #tpu.dot_dimension_numbers<[1], [0], [0], [1], [0, 0, 1, 1], [], []>} : vector<1x30xf32>, vector<30x30xf32>, vector<1x30xf32> -> vector<1x30xf32>
    %37 = arith.addf %35, %36 : vector<1x30xf32>
    %38 = math.tanh %37 : vector<1x30xf32>
    %39 = arith.index_cast %c3_i32 : i32 to index
    %c0_21 = arith.constant 0 : index
    %40 = vector.load %arg5[%39, %c0_21] : memref<8x30xf32, #tpu.memory_space<vmem>>, vector<1x30xf32>
    tpu.vector_store %arg5[%39, %c0_21], %38 {strides = array<i32>} : memref<8x30xf32, #tpu.memory_space<vmem>>, vector<1x30xf32>,
    %c4_i32 = arith.constant 4 : i32
    %41 = arith.index_cast %c4_i32 : i32 to index
    %c0_22 = arith.constant 0 : index
    %42 = vector.load %arg5[%41, %c0_22] : memref<8x30xf32, #tpu.memory_space<vmem>>, vector<1x30xf32>
    %cst_23 = arith.constant dense<0.000000e+00> : vector<1x30xf32>
    %43 = tpu.matmul %38, %0, %cst_23 {dimension_numbers = #tpu.dot_dimension_numbers<[1], [0], [0], [1], [0, 0, 1, 1], [], []>} : vector<1x30xf32>, vector<30x30xf32>, vector<1x30xf32> -> vector<1x30xf32>
    %44 = arith.addf %42, %43 : vector<1x30xf32>
    %45 = math.tanh %44 : vector<1x30xf32>
    %46 = arith.index_cast %c4_i32 : i32 to index
    %c0_24 = arith.constant 0 : index
    %47 = vector.load %arg5[%46, %c0_24] : memref<8x30xf32, #tpu.memory_space<vmem>>, vector<1x30xf32>
    tpu.vector_store %arg5[%46, %c0_24], %45 {strides = array<i32>} : memref<8x30xf32, #tpu.memory_space<vmem>>, vector<1x30xf32>,
    %c5_i32 = arith.constant 5 : i32
    %48 = arith.index_cast %c5_i32 : i32 to index
    %c0_25 = arith.constant 0 : index
    %49 = vector.load %arg5[%48, %c0_25] : memref<8x30xf32, #tpu.memory_space<vmem>>, vector<1x30xf32>
    %cst_26 = arith.constant dense<0.000000e+00> : vector<1x30xf32>
    %50 = tpu.matmul %45, %0, %cst_26 {dimension_numbers = #tpu.dot_dimension_numbers<[1], [0], [0], [1], [0, 0, 1, 1], [], []>} : vector<1x30xf32>, vector<30x30xf32>, vector<1x30xf32> -> vector<1x30xf32>
    %51 = arith.addf %49, %50 : vector<1x30xf32>
    %52 = math.tanh %51 : vector<1x30xf32>
    %53 = arith.index_cast %c5_i32 : i32 to index
    %c0_27 = arith.constant 0 : index
    %54 = vector.load %arg5[%53, %c0_27] : memref<8x30xf32, #tpu.memory_space<vmem>>, vector<1x30xf32>
    tpu.vector_store %arg5[%53, %c0_27], %52 {strides = array<i32>} : memref<8x30xf32, #tpu.memory_space<vmem>>, vector<1x30xf32>,
    %c6_i32 = arith.constant 6 : i32
    %55 = arith.index_cast %c6_i32 : i32 to index
    %c0_28 = arith.constant 0 : index
    %56 = vector.load %arg5[%55, %c0_28] : memref<8x30xf32, #tpu.memory_space<vmem>>, vector<1x30xf32>
    %cst_29 = arith.constant dense<0.000000e+00> : vector<1x30xf32>
    %57 = tpu.matmul %52, %0, %cst_29 {dimension_numbers = #tpu.dot_dimension_numbers<[1], [0], [0], [1], [0, 0, 1, 1], [], []>} : vector<1x30xf32>, vector<30x30xf32>, vector<1x30xf32> -> vector<1x30xf32>
    %58 = arith.addf %56, %57 : vector<1x30xf32>
    %59 = math.tanh %58 : vector<1x30xf32>
    %60 = arith.index_cast %c6_i32 : i32 to index
    %c0_30 = arith.constant 0 : index
    %61 = vector.load %arg5[%60, %c0_30] : memref<8x30xf32, #tpu.memory_space<vmem>>, vector<1x30xf32>
    tpu.vector_store %arg5[%60, %c0_30], %59 {strides = array<i32>} : memref<8x30xf32, #tpu.memory_space<vmem>>, vector<1x30xf32>,
    %c7_i32 = arith.constant 7 : i32
    %62 = arith.index_cast %c7_i32 : i32 to index
    %c0_31 = arith.constant 0 : index
    %63 = vector.load %arg5[%62, %c0_31] : memref<8x30xf32, #tpu.memory_space<vmem>>, vector<1x30xf32>
    %cst_32 = arith.constant dense<0.000000e+00> : vector<1x30xf32>
    %64 = tpu.matmul %59, %0, %cst_32 {dimension_numbers = #tpu.dot_dimension_numbers<[1], [0], [0], [1], [0, 0, 1, 1], [], []>} : vector<1x30xf32>, vector<30x30xf32>, vector<1x30xf32> -> vector<1x30xf32>
    %65 = arith.addf %63, %64 : vector<1x30xf32>
    %66 = math.tanh %65 : vector<1x30xf32>
    %67 = arith.index_cast %c7_i32 : i32 to index
    %c0_33 = arith.constant 0 : index
    %68 = vector.load %arg5[%67, %c0_33] : memref<8x30xf32, #tpu.memory_space<vmem>>, vector<1x30xf32>
    tpu.vector_store %arg5[%67, %c0_33], %66 {strides = array<i32>} : memref<8x30xf32, #tpu.memory_space<vmem>>, vector<1x30xf32>,
    %c8_i32 = arith.constant 8 : i32
    %c0_34 = arith.constant 0 : index
    %c0_35 = arith.constant 0 : index
    %69 = vector.load %arg4[%c0_34, %c0_35] : memref<1x30xf32, #tpu.memory_space<vmem>>, vector<1x30xf32>
    tpu.vector_store %arg4[%c0_34, %c0_35], %66 {strides = array<i32>} : memref<1x30xf32, #tpu.memory_space<vmem>>, vector<1x30xf32>,
    %c0_36 = arith.constant 0 : index
    %c0_37 = arith.constant 0 : index
    %70 = vector.load %arg5[%c0_36, %c0_37] : memref<8x30xf32, #tpu.memory_space<vmem>>, vector<8x30xf32>
    %71 = vector.broadcast %4 : vector<1x30xf32> to vector<8x30xf32>
    %72 = arith.mulf %70, %71 : vector<8x30xf32>
    %cst_38 = arith.constant dense<0.000000e+00> : vector<8xf32>
    %73 = vector.multi_reduction <add>, %72, %cst_38 [1] : vector<8x30xf32> to vector<8xf32>
    %74 = vector.shape_cast %73 : vector<8xf32> to vector<8x1xf32>
    %75 = vector.broadcast %5 : vector<1x1xf32> to vector<8x1xf32>
    %76 = arith.addf %74, %75 : vector<8x1xf32>
    %c0_39 = arith.constant 0 : index
    %c0_40 = arith.constant 0 : index
    %77 = vector.load %arg3[%c0_39, %c0_40] : memref<8x1xf32, #tpu.memory_space<vmem>>, vector<8x1xf32>
    tpu.vector_store %arg3[%c0_39, %c0_40], %76 {strides = array<i32>} : memref<8x1xf32, #tpu.memory_space<vmem>>, vector<8x1xf32>,
    return
  }
}

</mosaic_0001>

<llo_original>
// kernel: tpu_custom_call.1
$region0: #{tpu_custom_call.1}
  #allocation0 [shape = 'u32[]', space=smem, size = 0x4, offset = 0x4, fixed_abs, tag = 'smem constant byte address 0x4 - core index']
  #allocation1 [shape = 'u32[144,128]{1,0:T(1,128)}', space=vmem, size = 0x12000, scoped, tag = 'internal scratch']
  #allocation2 [shape = 'f32[8,30]{1,0:T(8,128)}', space=vmem, size = 0x1000, scoped, tag = 'scratch operand']
  %s0 = inlined_call_operand.vmem [shape: f32[8,1], index: 0, kind: input, shape index: {}]
  %s1 = inlined_call_operand.hbm [shape: f32[30,30], index: 1, kind: input, shape index: {}]
  %s2 = inlined_call_operand.vmem [shape: f32[5,30], index: 2, kind: input, shape index: {}]
  %s3 = inlined_call_operand.vmem [shape: f32[8,1], index: 3, kind: output, shape index: {0}]
  %s4 = inlined_call_operand.hbm [shape: f32[1,30], index: 4, kind: output, shape index: {1}]
  %5 = xla_tuple %s3, %s4
  %s6 = sld [smem:[#allocation0]]
  $region34: #{tpu_custom_call.1} parent=0
    _
  %s8 = ssub.s32 1, %s6
  %s9 = scalar_select 0, %s8, %s6
  $region1: #{tpu_custom_call.1} parent=0
    #allocation3 [shape = 'u8[16384]{0}', space=vmem, size = 0x4000, scoped, tag = 'input window, operand 1, single buffered']
    #allocation4 [shape = 's32[1]{0}', space=sflag, size = 0x4, scoped, tag = 'scoped memory for tpu_custom_call.1']
    #allocation5 [shape = 's32[1]{0}', space=sflag, size = 0x4, scoped, tag = 'scoped memory for tpu_custom_call.1']
    #allocation6 [shape = 'u8[512]{0}', space=vmem, size = 0x400, scoped, tag = 'output window, operand 1, single buffered']
    %10 = vsyncpa [#allocation4], 0
    %11 = vsyncpa [#allocation5], 0
    // Predicated region
    $region2: #{tpu_custom_call.1} parent=1 // pred_check
      _
    $region3: #{tpu_custom_call.1} parent=1 // pred_check_branch
      %13 = sbr.rel (0) target = $region5
    $region4: #{tpu_custom_call.1} parent=1 // pred_region
      _
    $region5: #{tpu_custom_call.1} parent=1 // pred_fallthru
      _
    // Predicated region
    $region6: #{tpu_custom_call.1} parent=1 // pred_check
      _
    $region7: #{tpu_custom_call.1} parent=1 // pred_check_branch
      %15 = sbr.rel (0) target = $region9
    $region8: #{tpu_custom_call.1} parent=1 // pred_region
      %s17 = ssub.s32 512, 512
      %18 = vsyncadd [#allocation4], %s17
      %s19 = sshll.u32 [#allocation3], 4
      %s20 = int_to_ptr.vmem [resolvable:$true] %s19
      %25 = dma.hbm_to_vmem [thread:$0]  %s1, 512, %s20, [#allocation4], 128, 128, 8
    $region9: #{tpu_custom_call.1} parent=1 // pred_fallthru
      _
    // Predicated region
    $region10: #{tpu_custom_call.1} parent=1 // pred_check
      _
    $region11: #{tpu_custom_call.1} parent=1 // pred_check_branch
      %27 = sbr.rel (0) target = $region13
    $region12: #{tpu_custom_call.1} parent=1 // pred_region
      _
    $region13: #{tpu_custom_call.1} parent=1 // pred_fallthru
      _
    // Predicated region
    $region14: #{tpu_custom_call.1} parent=1 // pred_check
      _
    $region15: #{tpu_custom_call.1} parent=1 // pred_check_branch
      %29 = sbr.rel (0) target = $region17
    $region16: #{tpu_custom_call.1} parent=1 // pred_region
      %30 = dma.done [#allocation4], 512
    $region17: #{tpu_custom_call.1} parent=1 // pred_fallthru
      _
    %v31 = vld [vmem:[#allocation3] sm:$0xff]
    %v32 = vld [vmem:[#allocation3 + $0x8] sm:$0xff]
    %v33 = vld [vmem:[#allocation3 + $0x10] sm:$0xff]
    %v34 = vld [vmem:[#allocation3 + $0x18] sm:$0x3f]
    %v35 = vld [vmem:[%s2] sm:$0x1]
    %v36 = vld [vmem:[%s2 + $0x1] sm:$0x1]
    %v37 = vld [vmem:[%s2 + $0x2] sm:$0x1]
    %v38 = vld [vmem:[%s2 + $0x3] sm:$0x1]
    %v39 = vld [vmem:[%s2 + $0x4] sm:$0x1]
    %v40 = vld [vmem:[%s0] sm:$0xff]
    %42 = vset.pattern.permute.xlu0 0
    %43 = vperm.xlu0 %42, %v40
    %v44 = vpop.permute.xlu0 %43
    %v46 = vlaneseq
    %v47 = vshrl.u32 %v46, 7
    %v48 = vsub.s32 0, %v47
    %v49 = vrot.slane %v36, %v48
    %v50 = vmul.f32 %v44, %v49
    %v51 = vlaneseq
    %v52 = vshrl.u32 %v51, 7
    %v53 = vsub.s32 0, %v52
    %v54 = vrot.slane %v37, %v53
    %v55 = vadd.f32 %v50, %v54
    %vm56 = vcmask 244736
    %57 = vst.msk [vmem:[#allocation2] sm:$0xff] %vm56, %v55
    %v58 = vld [vmem:[#allocation2] sm:$0x1]
    %v60 = vsel %vm56, %v35, 0
    %vm62 = vcmask 1045504
    %v64 = vsel %vm62, %v34, 0
    %66 = vmatprep.subr.mxu0 0.0
    %67 = vmatpush1.msra.mxu0 0.0
    %68 = vmatprep.subr.mxu0 0.0
    %69 = vmatpush1.msra.mxu0 0.0
    %70 = vmatprep.subr.mxu0 0.0
    %71 = vmatpush1.msra.mxu0 0.0
    %72 = vmatprep.subr.mxu0 0.0
    %73 = vmatpush1.msra.mxu0 0.0
    %74 = vmatprep.subr.mxu0 0.0
    %75 = vmatpush1.msra.mxu0 0.0
    %76 = vmatprep.subr.mxu0 0.0
    %77 = vmatpush1.msra.mxu0 0.0
    %78 = vmatprep.subr.mxu0 0.0
    %79 = vmatpush1.msra.mxu0 0.0
    %80 = vmatprep.subr.mxu0 0.0
    %81 = vmatpush1.msra.mxu0 0.0
    %82 = vmatprep.subr.mxu0 0.0
    %83 = vmatpush1.msra.mxu0 0.0
    %84 = vmatprep.subr.mxu0 0.0
    %85 = vmatpush1.msra.mxu0 0.0
    %86 = vmatprep.subr.mxu0 0.0
    %87 = vmatpush1.msra.mxu0 0.0
    %88 = vmatprep.subr.mxu0 0.0
    %89 = vmatpush1.msra.mxu0 0.0
    %90 = vmatprep.subr.mxu0 0.0
    %91 = vmatpush1.msra.mxu0 %v64
    %92 = vmatprep.subr.mxu0 0.0
    %93 = vmatpush1.msra.mxu0 %v33
    %94 = vmatprep.subr.mxu0 0.0
    %95 = vmatpush1.msra.mxu0 %v32
    %96 = vmatprep.subr.mxu0 0.0
    %97 = vmatpush1.msra.mxu0 %v31
    %98 = vmatprep.subr.mxu0 0.0
    %99 = vmatpush2.msra.mxu0 0.0
    %100 = vmatprep.subr.mxu0 0.0
    %101 = vmatpush2.msra.mxu0 0.0
    %102 = vmatprep.subr.mxu0 0.0
    %103 = vmatpush2.msra.mxu0 0.0
    %104 = vmatprep.subr.mxu0 0.0
    %105 = vmatpush2.msra.mxu0 0.0
    %106 = vmatprep.subr.mxu0 0.0
    %107 = vmatpush2.msra.mxu0 0.0
    %108 = vmatprep.subr.mxu0 0.0
    %109 = vmatpush2.msra.mxu0 0.0
    %110 = vmatprep.subr.mxu0 0.0
    %111 = vmatpush2.msra.mxu0 0.0
    %112 = vmatprep.subr.mxu0 0.0
    %113 = vmatpush2.msra.mxu0 0.0
    %114 = vmatprep.subr.mxu0 0.0
    %115 = vmatpush2.msra.mxu0 0.0
    %116 = vmatprep.subr.mxu0 0.0
    %117 = vmatpush2.msra.mxu0 0.0
    %118 = vmatprep.subr.mxu0 0.0
    %119 = vmatpush2.msra.mxu0 0.0
    %120 = vmatprep.subr.mxu0 0.0
    %121 = vmatpush2.msra.mxu0 0.0
    %122 = vmatprep.subr.mxu0 0.0
    %123 = vmatpush2.msra.mxu0 0.0
    %124 = vmatprep.subr.mxu0 0.0
    %125 = vmatpush2.msra.mxu0 0.0
    %126 = vmatprep.subr.mxu0 0.0
    %127 = vmatpush2.msra.mxu0 0.0
    %128 = vmatprep.subr.mxu0 0.0
    %129 = vmatpush2.msra.mxu0 0.0
    %130 = vmatprep.mubr.f32.mxu0 0.0
    %131 = vmatmul.mubr.f32.gmra.mxu0 %v60
    %v132 = vpop.f32.mrf.mxu0
    %v133 = vadd.f32 0.0, %v132
    %v134 = vpop.f32.mrf.mxu0
    %135 = vdwg.mxu0
    %v136 = vadd.f32 %v58, %v133
    %v137 = vtanh.pop %v136
    %vm138 = vcmask 237568
    %139 = vst.msk [vmem:[#allocation2] sm:$0x1] %vm138, %v137
    %v140 = vld [vmem:[#allocation2 + $0x1] sm:$0x1]
    %v142 = vsel %vm56, %v137, 0
    %144 = vmatprep.subr.mxu0 0.0
    %145 = vmatpush1.msra.mxu0 0.0
    %146 = vmatprep.subr.mxu0 0.0
    %147 = vmatpush1.msra.mxu0 0.0
    %148 = vmatprep.subr.mxu0 0.0
    %149 = vmatpush1.msra.mxu0 0.0
    %150 = vmatprep.subr.mxu0 0.0
    %151 = vmatpush1.msra.mxu0 0.0
    %152 = vmatprep.subr.mxu0 0.0
    %153 = vmatpush1.msra.mxu0 0.0
    %154 = vmatprep.subr.mxu0 0.0
    %155 = vmatpush1.msra.mxu0 0.0
    %156 = vmatprep.subr.mxu0 0.0
    %157 = vmatpush1.msra.mxu0 0.0
    %158 = vmatprep.subr.mxu0 0.0
    %159 = vmatpush1.msra.mxu0 0.0
    %160 = vmatprep.subr.mxu0 0.0
    %161 = vmatpush1.msra.mxu0 0.0
    %162 = vmatprep.subr.mxu0 0.0
    %163 = vmatpush1.msra.mxu0 0.0
    %164 = vmatprep.subr.mxu0 0.0
    %165 = vmatpush1.msra.mxu0 0.0
    %166 = vmatprep.subr.mxu0 0.0
    %167 = vmatpush1.msra.mxu0 0.0
    %168 = vmatprep.subr.mxu0 0.0
    %169 = vmatpush1.msra.mxu0 %v64
    %170 = vmatprep.subr.mxu0 0.0
    %171 = vmatpush1.msra.mxu0 %v33
    %172 = vmatprep.subr.mxu0 0.0
    %173 = vmatpush1.msra.mxu0 %v32
    %174 = vmatprep.subr.mxu0 0.0
    %175 = vmatpush1.msra.mxu0 %v31
    %176 = vmatprep.subr.mxu0 0.0
    %177 = vmatpush2.msra.mxu0 0.0
    %178 = vmatprep.subr.mxu0 0.0
    %179 = vmatpush2.msra.mxu0 0.0
    %180 = vmatprep.subr.mxu0 0.0
    %181 = vmatpush2.msra.mxu0 0.0
    %182 = vmatprep.subr.mxu0 0.0
    %183 = vmatpush2.msra.mxu0 0.0
    %184 = vmatprep.subr.mxu0 0.0
    %185 = vmatpush2.msra.mxu0 0.0
    %186 = vmatprep.subr.mxu0 0.0
    %187 = vmatpush2.msra.mxu0 0.0
    %188 = vmatprep.subr.mxu0 0.0
    %189 = vmatpush2.msra.mxu0 0.0
    %190 = vmatprep.subr.mxu0 0.0
    %191 = vmatpush2.msra.mxu0 0.0
    %192 = vmatprep.subr.mxu0 0.0
    %193 = vmatpush2.msra.mxu0 0.0
    %194 = vmatprep.subr.mxu0 0.0
    %195 = vmatpush2.msra.mxu0 0.0
    %196 = vmatprep.subr.mxu0 0.0
    %197 = vmatpush2.msra.mxu0 0.0
    %198 = vmatprep.subr.mxu0 0.0
    %199 = vmatpush2.msra.mxu0 0.0
    %200 = vmatprep.subr.mxu0 0.0
    %201 = vmatpush2.msra.mxu0 0.0
    %202 = vmatprep.subr.mxu0 0.0
    %203 = vmatpush2.msra.mxu0 0.0
    %204 = vmatprep.subr.mxu0 0.0
    %205 = vmatpush2.msra.mxu0 0.0
    %206 = vmatprep.subr.mxu0 0.0
    %207 = vmatpush2.msra.mxu0 0.0
    %208 = vmatprep.mubr.f32.mxu0 0.0
    %209 = vmatmul.mubr.f32.gmra.mxu0 %v142
    %v210 = vpop.f32.mrf.mxu0
    %v211 = vadd.f32 0.0, %v210
    %v212 = vpop.f32.mrf.mxu0
    %213 = vdwg.mxu0
    %v214 = vadd.f32 %v140, %v211
    %v215 = vtanh.pop %v214
    %216 = vst.msk [vmem:[#allocation2 + $0x1] sm:$0x1] %vm138, %v215
    %v217 = vld [vmem:[#allocation2 + $0x2] sm:$0x1]
    %v219 = vsel %vm56, %v215, 0
    %221 = vmatprep.subr.mxu0 0.0
    %222 = vmatpush1.msra.mxu0 0.0
    %223 = vmatprep.subr.mxu0 0.0
    %224 = vmatpush1.msra.mxu0 0.0
    %225 = vmatprep.subr.mxu0 0.0
    %226 = vmatpush1.msra.mxu0 0.0
    %227 = vmatprep.subr.mxu0 0.0
    %228 = vmatpush1.msra.mxu0 0.0
    %229 = vmatprep.subr.mxu0 0.0
    %230 = vmatpush1.msra.mxu0 0.0
    %231 = vmatprep.subr.mxu0 0.0
    %232 = vmatpush1.msra.mxu0 0.0
    %233 = vmatprep.subr.mxu0 0.0
    %234 = vmatpush1.msra.mxu0 0.0
    %235 = vmatprep.subr.mxu0 0.0
    %236 = vmatpush1.msra.mxu0 0.0
    %237 = vmatprep.subr.mxu0 0.0
    %238 = vmatpush1.msra.mxu0 0.0
    %239 = vmatprep.subr.mxu0 0.0
    %240 = vmatpush1.msra.mxu0 0.0
    %241 = vmatprep.subr.mxu0 0.0
    %242 = vmatpush1.msra.mxu0 0.0
    %243 = vmatprep.subr.mxu0 0.0
    %244 = vmatpush1.msra.mxu0 0.0
    %245 = vmatprep.subr.mxu0 0.0
    %246 = vmatpush1.msra.mxu0 %v64
    %247 = vmatprep.subr.mxu0 0.0
    %248 = vmatpush1.msra.mxu0 %v33
    %249 = vmatprep.subr.mxu0 0.0
    %250 = vmatpush1.msra.mxu0 %v32
    %251 = vmatprep.subr.mxu0 0.0
    %252 = vmatpush1.msra.mxu0 %v31
    %253 = vmatprep.subr.mxu0 0.0
    %254 = vmatpush2.msra.mxu0 0.0
    %255 = vmatprep.subr.mxu0 0.0
    %256 = vmatpush2.msra.mxu0 0.0
    %257 = vmatprep.subr.mxu0 0.0
    %258 = vmatpush2.msra.mxu0 0.0
    %259 = vmatprep.subr.mxu0 0.0
    %260 = vmatpush2.msra.mxu0 0.0
    %261 = vmatprep.subr.mxu0 0.0
    %262 = vmatpush2.msra.mxu0 0.0
    %263 = vmatprep.subr.mxu0 0.0
    %264 = vmatpush2.msra.mxu0 0.0
    %265 = vmatprep.subr.mxu0 0.0
    %266 = vmatpush2.msra.mxu0 0.0
    %267 = vmatprep.subr.mxu0 0.0
    %268 = vmatpush2.msra.mxu0 0.0
    %269 = vmatprep.subr.mxu0 0.0
    %270 = vmatpush2.msra.mxu0 0.0
    %271 = vmatprep.subr.mxu0 0.0
    %272 = vmatpush2.msra.mxu0 0.0
    %273 = vmatprep.subr.mxu0 0.0
    %274 = vmatpush2.msra.mxu0 0.0
    %275 = vmatprep.subr.mxu0 0.0
    %276 = vmatpush2.msra.mxu0 0.0
    %277 = vmatprep.subr.mxu0 0.0
    %278 = vmatpush2.msra.mxu0 0.0
    %279 = vmatprep.subr.mxu0 0.0
    %280 = vmatpush2.msra.mxu0 0.0
    %281 = vmatprep.subr.mxu0 0.0
    %282 = vmatpush2.msra.mxu0 0.0
    %283 = vmatprep.subr.mxu0 0.0
    %284 = vmatpush2.msra.mxu0 0.0
    %285 = vmatprep.mubr.f32.mxu0 0.0
    %286 = vmatmul.mubr.f32.gmra.mxu0 %v219
    %v287 = vpop.f32.mrf.mxu0
    %v288 = vadd.f32 0.0, %v287
    %v289 = vpop.f32.mrf.mxu0
    %290 = vdwg.mxu0
    %v291 = vadd.f32 %v217, %v288
    %v292 = vtanh.pop %v291
    %293 = vst.msk [vmem:[#allocation2 + $0x2] sm:$0x1] %vm138, %v292
    %v294 = vld [vmem:[#allocation2 + $0x3] sm:$0x1]
    %v296 = vsel %vm56, %v292, 0
    %298 = vmatprep.subr.mxu0 0.0
    %299 = vmatpush1.msra.mxu0 0.0
    %300 = vmatprep.subr.mxu0 0.0
    %301 = vmatpush1.msra.mxu0 0.0
    %302 = vmatprep.subr.mxu0 0.0
    %303 = vmatpush1.msra.mxu0 0.0
    %304 = vmatprep.subr.mxu0 0.0
    %305 = vmatpush1.msra.mxu0 0.0
    %306 = vmatprep.subr.mxu0 0.0
    %307 = vmatpush1.msra.mxu0 0.0
    %308 = vmatprep.subr.mxu0 0.0
    %309 = vmatpush1.msra.mxu0 0.0
    %310 = vmatprep.subr.mxu0 0.0
    %311 = vmatpush1.msra.mxu0 0.0
    %312 = vmatprep.subr.mxu0 0.0
    %313 = vmatpush1.msra.mxu0 0.0
    %314 = vmatprep.subr.mxu0 0.0
    %315 = vmatpush1.msra.mxu0 0.0
    %316 = vmatprep.subr.mxu0 0.0
    %317 = vmatpush1.msra.mxu0 0.0
    %318 = vmatprep.subr.mxu0 0.0
    %319 = vmatpush1.msra.mxu0 0.0
    %320 = vmatprep.subr.mxu0 0.0
    %321 = vmatpush1.msra.mxu0 0.0
    %322 = vmatprep.subr.mxu0 0.0
    %323 = vmatpush1.msra.mxu0 %v64
    %324 = vmatprep.subr.mxu0 0.0
    %325 = vmatpush1.msra.mxu0 %v33
    %326 = vmatprep.subr.mxu0 0.0
    %327 = vmatpush1.msra.mxu0 %v32
    %328 = vmatprep.subr.mxu0 0.0
    %329 = vmatpush1.msra.mxu0 %v31
    %330 = vmatprep.subr.mxu0 0.0
    %331 = vmatpush2.msra.mxu0 0.0
    %332 = vmatprep.subr.mxu0 0.0
    %333 = vmatpush2.msra.mxu0 0.0
    %334 = vmatprep.subr.mxu0 0.0
    %335 = vmatpush2.msra.mxu0 0.0
    %336 = vmatprep.subr.mxu0 0.0
    %337 = vmatpush2.msra.mxu0 0.0
    %338 = vmatprep.subr.mxu0 0.0
    %339 = vmatpush2.msra.mxu0 0.0
    %340 = vmatprep.subr.mxu0 0.0
    %341 = vmatpush2.msra.mxu0 0.0
    %342 = vmatprep.subr.mxu0 0.0
    %343 = vmatpush2.msra.mxu0 0.0
    %344 = vmatprep.subr.mxu0 0.0
    %345 = vmatpush2.msra.mxu0 0.0
    %346 = vmatprep.subr.mxu0 0.0
    %347 = vmatpush2.msra.mxu0 0.0
    %348 = vmatprep.subr.mxu0 0.0
    %349 = vmatpush2.msra.mxu0 0.0
    %350 = vmatprep.subr.mxu0 0.0
    %351 = vmatpush2.msra.mxu0 0.0
    %352 = vmatprep.subr.mxu0 0.0
    %353 = vmatpush2.msra.mxu0 0.0
    %354 = vmatprep.subr.mxu0 0.0
    %355 = vmatpush2.msra.mxu0 0.0
    %356 = vmatprep.subr.mxu0 0.0
    %357 = vmatpush2.msra.mxu0 0.0
    %358 = vmatprep.subr.mxu0 0.0
    %359 = vmatpush2.msra.mxu0 0.0
    %360 = vmatprep.subr.mxu0 0.0
    %361 = vmatpush2.msra.mxu0 0.0
    %362 = vmatprep.mubr.f32.mxu0 0.0
    %363 = vmatmul.mubr.f32.gmra.mxu0 %v296
    %v364 = vpop.f32.mrf.mxu0
    %v365 = vadd.f32 0.0, %v364
    %v366 = vpop.f32.mrf.mxu0
    %367 = vdwg.mxu0
    %v368 = vadd.f32 %v294, %v365
    %v369 = vtanh.pop %v368
    %370 = vst.msk [vmem:[#allocation2 + $0x3] sm:$0x1] %vm138, %v369
    %v371 = vld [vmem:[#allocation2 + $0x4] sm:$0x1]
    %v373 = vsel %vm56, %v369, 0
    %375 = vmatprep.subr.mxu0 0.0
    %376 = vmatpush1.msra.mxu0 0.0
    %377 = vmatprep.subr.mxu0 0.0
    %378 = vmatpush1.msra.mxu0 0.0
    %379 = vmatprep.subr.mxu0 0.0
    %380 = vmatpush1.msra.mxu0 0.0
    %381 = vmatprep.subr.mxu0 0.0
    %382 = vmatpush1.msra.mxu0 0.0
    %383 = vmatprep.subr.mxu0 0.0
    %384 = vmatpush1.msra.mxu0 0.0
    %385 = vmatprep.subr.mxu0 0.0
    %386 = vmatpush1.msra.mxu0 0.0
    %387 = vmatprep.subr.mxu0 0.0
    %388 = vmatpush1.msra.mxu0 0.0
    %389 = vmatprep.subr.mxu0 0.0
    %390 = vmatpush1.msra.mxu0 0.0
    %391 = vmatprep.subr.mxu0 0.0
    %392 = vmatpush1.msra.mxu0 0.0
    %393 = vmatprep.subr.mxu0 0.0
    %394 = vmatpush1.msra.mxu0 0.0
    %395 = vmatprep.subr.mxu0 0.0
    %396 = vmatpush1.msra.mxu0 0.0
    %397 = vmatprep.subr.mxu0 0.0
    %398 = vmatpush1.msra.mxu0 0.0
    %399 = vmatprep.subr.mxu0 0.0
    %400 = vmatpush1.msra.mxu0 %v64
    %401 = vmatprep.subr.mxu0 0.0
    %402 = vmatpush1.msra.mxu0 %v33
    %403 = vmatprep.subr.mxu0 0.0
    %404 = vmatpush1.msra.mxu0 %v32
    %405 = vmatprep.subr.mxu0 0.0
    %406 = vmatpush1.msra.mxu0 %v31
    %407 = vmatprep.subr.mxu0 0.0
    %408 = vmatpush2.msra.mxu0 0.0
    %409 = vmatprep.subr.mxu0 0.0
    %410 = vmatpush2.msra.mxu0 0.0
    %411 = vmatprep.subr.mxu0 0.0
    %412 = vmatpush2.msra.mxu0 0.0
    %413 = vmatprep.subr.mxu0 0.0
    %414 = vmatpush2.msra.mxu0 0.0
    %415 = vmatprep.subr.mxu0 0.0
    %416 = vmatpush2.msra.mxu0 0.0
    %417 = vmatprep.subr.mxu0 0.0
    %418 = vmatpush2.msra.mxu0 0.0
    %419 = vmatprep.subr.mxu0 0.0
    %420 = vmatpush2.msra.mxu0 0.0
    %421 = vmatprep.subr.mxu0 0.0
    %422 = vmatpush2.msra.mxu0 0.0
    %423 = vmatprep.subr.mxu0 0.0
    %424 = vmatpush2.msra.mxu0 0.0
    %425 = vmatprep.subr.mxu0 0.0
    %426 = vmatpush2.msra.mxu0 0.0
    %427 = vmatprep.subr.mxu0 0.0
    %428 = vmatpush2.msra.mxu0 0.0
    %429 = vmatprep.subr.mxu0 0.0
    %430 = vmatpush2.msra.mxu0 0.0
    %431 = vmatprep.subr.mxu0 0.0
    %432 = vmatpush2.msra.mxu0 0.0
    %433 = vmatprep.subr.mxu0 0.0
    %434 = vmatpush2.msra.mxu0 0.0
    %435 = vmatprep.subr.mxu0 0.0
    %436 = vmatpush2.msra.mxu0 0.0
    %437 = vmatprep.subr.mxu0 0.0
    %438 = vmatpush2.msra.mxu0 0.0
    %439 = vmatprep.mubr.f32.mxu0 0.0
    %440 = vmatmul.mubr.f32.gmra.mxu0 %v373
    %v441 = vpop.f32.mrf.mxu0
    %v442 = vadd.f32 0.0, %v441
    %v443 = vpop.f32.mrf.mxu0
    %444 = vdwg.mxu0
    %v445 = vadd.f32 %v371, %v442
    %v446 = vtanh.pop %v445
    %447 = vst.msk [vmem:[#allocation2 + $0x4] sm:$0x1] %vm138, %v446
    %v448 = vld [vmem:[#allocation2 + $0x5] sm:$0x1]
    %v450 = vsel %vm56, %v446, 0
    %452 = vmatprep.subr.mxu0 0.0
    %453 = vmatpush1.msra.mxu0 0.0
    %454 = vmatprep.subr.mxu0 0.0
    %455 = vmatpush1.msra.mxu0 0.0
    %456 = vmatprep.subr.mxu0 0.0
    %457 = vmatpush1.msra.mxu0 0.0
    %458 = vmatprep.subr.mxu0 0.0
    %459 = vmatpush1.msra.mxu0 0.0
    %460 = vmatprep.subr.mxu0 0.0
    %461 = vmatpush1.msra.mxu0 0.0
    %462 = vmatprep.subr.mxu0 0.0
    %463 = vmatpush1.msra.mxu0 0.0
    %464 = vmatprep.subr.mxu0 0.0
    %465 = vmatpush1.msra.mxu0 0.0
    %466 = vmatprep.subr.mxu0 0.0
    %467 = vmatpush1.msra.mxu0 0.0
    %468 = vmatprep.subr.mxu0 0.0
    %469 = vmatpush1.msra.mxu0 0.0
    %470 = vmatprep.subr.mxu0 0.0
    %471 = vmatpush1.msra.mxu0 0.0
    %472 = vmatprep.subr.mxu0 0.0
    %473 = vmatpush1.msra.mxu0 0.0
    %474 = vmatprep.subr.mxu0 0.0
    %475 = vmatpush1.msra.mxu0 0.0
    %476 = vmatprep.subr.mxu0 0.0
    %477 = vmatpush1.msra.mxu0 %v64
    %478 = vmatprep.subr.mxu0 0.0
    %479 = vmatpush1.msra.mxu0 %v33
    %480 = vmatprep.subr.mxu0 0.0
    %481 = vmatpush1.msra.mxu0 %v32
    %482 = vmatprep.subr.mxu0 0.0
    %483 = vmatpush1.msra.mxu0 %v31
    %484 = vmatprep.subr.mxu0 0.0
    %485 = vmatpush2.msra.mxu0 0.0
    %486 = vmatprep.subr.mxu0 0.0
    %487 = vmatpush2.msra.mxu0 0.0
    %488 = vmatprep.subr.mxu0 0.0
    %489 = vmatpush2.msra.mxu0 0.0
    %490 = vmatprep.subr.mxu0 0.0
    %491 = vmatpush2.msra.mxu0 0.0
    %492 = vmatprep.subr.mxu0 0.0
    %493 = vmatpush2.msra.mxu0 0.0
    %494 = vmatprep.subr.mxu0 0.0
    %495 = vmatpush2.msra.mxu0 0.0
    %496 = vmatprep.subr.mxu0 0.0
    %497 = vmatpush2.msra.mxu0 0.0
    %498 = vmatprep.subr.mxu0 0.0
    %499 = vmatpush2.msra.mxu0 0.0
    %500 = vmatprep.subr.mxu0 0.0
    %501 = vmatpush2.msra.mxu0 0.0
    %502 = vmatprep.subr.mxu0 0.0
    %503 = vmatpush2.msra.mxu0 0.0
    %504 = vmatprep.subr.mxu0 0.0
    %505 = vmatpush2.msra.mxu0 0.0
    %506 = vmatprep.subr.mxu0 0.0
    %507 = vmatpush2.msra.mxu0 0.0
    %508 = vmatprep.subr.mxu0 0.0
    %509 = vmatpush2.msra.mxu0 0.0
    %510 = vmatprep.subr.mxu0 0.0
    %511 = vmatpush2.msra.mxu0 0.0
    %512 = vmatprep.subr.mxu0 0.0
    %513 = vmatpush2.msra.mxu0 0.0
    %514 = vmatprep.subr.mxu0 0.0
    %515 = vmatpush2.msra.mxu0 0.0
    %516 = vmatprep.mubr.f32.mxu0 0.0
    %517 = vmatmul.mubr.f32.gmra.mxu0 %v450
    %v518 = vpop.f32.mrf.mxu0
    %v519 = vadd.f32 0.0, %v518
    %v520 = vpop.f32.mrf.mxu0
    %521 = vdwg.mxu0
    %v522 = vadd.f32 %v448, %v519
    %v523 = vtanh.pop %v522
    %524 = vst.msk [vmem:[#allocation2 + $0x5] sm:$0x1] %vm138, %v523
    %v525 = vld [vmem:[#allocation2 + $0x6] sm:$0x1]
    %v527 = vsel %vm56, %v523, 0
    %529 = vmatprep.subr.mxu0 0.0
    %530 = vmatpush1.msra.mxu0 0.0
    %531 = vmatprep.subr.mxu0 0.0
    %532 = vmatpush1.msra.mxu0 0.0
    %533 = vmatprep.subr.mxu0 0.0
    %534 = vmatpush1.msra.mxu0 0.0
    %535 = vmatprep.subr.mxu0 0.0
    %536 = vmatpush1.msra.mxu0 0.0
    %537 = vmatprep.subr.mxu0 0.0
    %538 = vmatpush1.msra.mxu0 0.0
    %539 = vmatprep.subr.mxu0 0.0
    %540 = vmatpush1.msra.mxu0 0.0
    %541 = vmatprep.subr.mxu0 0.0
    %542 = vmatpush1.msra.mxu0 0.0
    %543 = vmatprep.subr.mxu0 0.0
    %544 = vmatpush1.msra.mxu0 0.0
    %545 = vmatprep.subr.mxu0 0.0
    %546 = vmatpush1.msra.mxu0 0.0
    %547 = vmatprep.subr.mxu0 0.0
    %548 = vmatpush1.msra.mxu0 0.0
    %549 = vmatprep.subr.mxu0 0.0
    %550 = vmatpush1.msra.mxu0 0.0
    %551 = vmatprep.subr.mxu0 0.0
    %552 = vmatpush1.msra.mxu0 0.0
    %553 = vmatprep.subr.mxu0 0.0
    %554 = vmatpush1.msra.mxu0 %v64
    %555 = vmatprep.subr.mxu0 0.0
    %556 = vmatpush1.msra.mxu0 %v33
    %557 = vmatprep.subr.mxu0 0.0
    %558 = vmatpush1.msra.mxu0 %v32
    %559 = vmatprep.subr.mxu0 0.0
    %560 = vmatpush1.msra.mxu0 %v31
    %561 = vmatprep.subr.mxu0 0.0
    %562 = vmatpush2.msra.mxu0 0.0
    %563 = vmatprep.subr.mxu0 0.0
    %564 = vmatpush2.msra.mxu0 0.0
    %565 = vmatprep.subr.mxu0 0.0
    %566 = vmatpush2.msra.mxu0 0.0
    %567 = vmatprep.subr.mxu0 0.0
    %568 = vmatpush2.msra.mxu0 0.0
    %569 = vmatprep.subr.mxu0 0.0
    %570 = vmatpush2.msra.mxu0 0.0
    %571 = vmatprep.subr.mxu0 0.0
    %572 = vmatpush2.msra.mxu0 0.0
    %573 = vmatprep.subr.mxu0 0.0
    %574 = vmatpush2.msra.mxu0 0.0
    %575 = vmatprep.subr.mxu0 0.0
    %576 = vmatpush2.msra.mxu0 0.0
    %577 = vmatprep.subr.mxu0 0.0
    %578 = vmatpush2.msra.mxu0 0.0
    %579 = vmatprep.subr.mxu0 0.0
    %580 = vmatpush2.msra.mxu0 0.0
    %581 = vmatprep.subr.mxu0 0.0
    %582 = vmatpush2.msra.mxu0 0.0
    %583 = vmatprep.subr.mxu0 0.0
    %584 = vmatpush2.msra.mxu0 0.0
    %585 = vmatprep.subr.mxu0 0.0
    %586 = vmatpush2.msra.mxu0 0.0
    %587 = vmatprep.subr.mxu0 0.0
    %588 = vmatpush2.msra.mxu0 0.0
    %589 = vmatprep.subr.mxu0 0.0
    %590 = vmatpush2.msra.mxu0 0.0
    %591 = vmatprep.subr.mxu0 0.0
    %592 = vmatpush2.msra.mxu0 0.0
    %593 = vmatprep.mubr.f32.mxu0 0.0
    %594 = vmatmul.mubr.f32.gmra.mxu0 %v527
    %v595 = vpop.f32.mrf.mxu0
    %v596 = vadd.f32 0.0, %v595
    %v597 = vpop.f32.mrf.mxu0
    %598 = vdwg.mxu0
    %v599 = vadd.f32 %v525, %v596
    %v600 = vtanh.pop %v599
    %601 = vst.msk [vmem:[#allocation2 + $0x6] sm:$0x1] %vm138, %v600
    %v602 = vld [vmem:[#allocation2 + $0x7] sm:$0x1]
    %v604 = vsel %vm56, %v600, 0
    %606 = vmatprep.subr.mxu0 0.0
    %607 = vmatpush1.msra.mxu0 0.0
    %608 = vmatprep.subr.mxu0 0.0
    %609 = vmatpush1.msra.mxu0 0.0
    %610 = vmatprep.subr.mxu0 0.0
    %611 = vmatpush1.msra.mxu0 0.0
    %612 = vmatprep.subr.mxu0 0.0
    %613 = vmatpush1.msra.mxu0 0.0
    %614 = vmatprep.subr.mxu0 0.0
    %615 = vmatpush1.msra.mxu0 0.0
    %616 = vmatprep.subr.mxu0 0.0
    %617 = vmatpush1.msra.mxu0 0.0
    %618 = vmatprep.subr.mxu0 0.0
    %619 = vmatpush1.msra.mxu0 0.0
    %620 = vmatprep.subr.mxu0 0.0
    %621 = vmatpush1.msra.mxu0 0.0
    %622 = vmatprep.subr.mxu0 0.0
    %623 = vmatpush1.msra.mxu0 0.0
    %624 = vmatprep.subr.mxu0 0.0
    %625 = vmatpush1.msra.mxu0 0.0
    %626 = vmatprep.subr.mxu0 0.0
    %627 = vmatpush1.msra.mxu0 0.0
    %628 = vmatprep.subr.mxu0 0.0
    %629 = vmatpush1.msra.mxu0 0.0
    %630 = vmatprep.subr.mxu0 0.0
    %631 = vmatpush1.msra.mxu0 %v64
    %632 = vmatprep.subr.mxu0 0.0
    %633 = vmatpush1.msra.mxu0 %v33
    %634 = vmatprep.subr.mxu0 0.0
    %635 = vmatpush1.msra.mxu0 %v32
    %636 = vmatprep.subr.mxu0 0.0
    %637 = vmatpush1.msra.mxu0 %v31
    %638 = vmatprep.subr.mxu0 0.0
    %639 = vmatpush2.msra.mxu0 0.0
    %640 = vmatprep.subr.mxu0 0.0
    %641 = vmatpush2.msra.mxu0 0.0
    %642 = vmatprep.subr.mxu0 0.0
    %643 = vmatpush2.msra.mxu0 0.0
    %644 = vmatprep.subr.mxu0 0.0
    %645 = vmatpush2.msra.mxu0 0.0
    %646 = vmatprep.subr.mxu0 0.0
    %647 = vmatpush2.msra.mxu0 0.0
    %648 = vmatprep.subr.mxu0 0.0
    %649 = vmatpush2.msra.mxu0 0.0
    %650 = vmatprep.subr.mxu0 0.0
    %651 = vmatpush2.msra.mxu0 0.0
    %652 = vmatprep.subr.mxu0 0.0
    %653 = vmatpush2.msra.mxu0 0.0
    %654 = vmatprep.subr.mxu0 0.0
    %655 = vmatpush2.msra.mxu0 0.0
    %656 = vmatprep.subr.mxu0 0.0
    %657 = vmatpush2.msra.mxu0 0.0
    %658 = vmatprep.subr.mxu0 0.0
    %659 = vmatpush2.msra.mxu0 0.0
    %660 = vmatprep.subr.mxu0 0.0
    %661 = vmatpush2.msra.mxu0 0.0
    %662 = vmatprep.subr.mxu0 0.0
    %663 = vmatpush2.msra.mxu0 0.0
    %664 = vmatprep.subr.mxu0 0.0
    %665 = vmatpush2.msra.mxu0 0.0
    %666 = vmatprep.subr.mxu0 0.0
    %667 = vmatpush2.msra.mxu0 0.0
    %668 = vmatprep.subr.mxu0 0.0
    %669 = vmatpush2.msra.mxu0 0.0
    %670 = vmatprep.mubr.f32.mxu0 0.0
    %671 = vmatmul.mubr.f32.gmra.mxu0 %v604
    %v672 = vpop.f32.mrf.mxu0
    %v673 = vadd.f32 0.0, %v672
    %v674 = vpop.f32.mrf.mxu0
    %675 = vdwg.mxu0
    %v676 = vadd.f32 %v602, %v673
    %v677 = vtanh.pop %v676
    %678 = vst.msk [vmem:[#allocation2 + $0x7] sm:$0x1] %vm138, %v677
    %679 = vst.msk [vmem:[#allocation6] sm:$0x1] %vm138, %v677
    %v680 = vld [vmem:[#allocation2] sm:$0xff]
    %v681 = vlaneseq
    %v682 = vshrl.u32 %v681, 7
    %v683 = vsub.s32 0, %v682
    %v684 = vrot.slane %v38, %v683
    %v685 = vmul.f32 %v680, %v684
    %v686 = vsel %vm56, %v685, 0.0
    %687 = vadd.xlane.f32.xlu0 %v686
    %v688 = vpop.xlane.xlu0 %687
    %v689 = vlaneseq
    %v690 = vshrl.u32 %v689, 7
    %v691 = vsub.s32 0, %v690
    %v692 = vrot.slane %v39, %v691
    %v693 = vadd.f32 %v688, %v692
    %vm694 = vcmask 7168
    %695 = vst.msk [vmem:[%s3] sm:$0xff] %vm694, %v693
    // Predicated region
    $region18: #{tpu_custom_call.1} parent=1 // pred_check
      _
    $region19: #{tpu_custom_call.1} parent=1 // pred_check_branch
      %697 = sbr.rel (0) target = $region21
    $region20: #{tpu_custom_call.1} parent=1 // pred_region
      _
    $region21: #{tpu_custom_call.1} parent=1 // pred_fallthru
      _
    // Predicated region
    $region22: #{tpu_custom_call.1} parent=1 // pred_check
      _
    $region23: #{tpu_custom_call.1} parent=1 // pred_check_branch
      %699 = sbr.rel (0) target = $region25
    $region24: #{tpu_custom_call.1} parent=1 // pred_region
      %s701 = ssub.s32 16, 16
      %702 = vsyncadd [#allocation5], %s701
      %s704 = sshll.u32 [#allocation6], 4
      %s705 = int_to_ptr.vmem [resolvable:$true] %s704
      %707 = dma.vmem_to_hbm [thread:$0]  %s705, 16, %s4, [#allocation5]
    $region25: #{tpu_custom_call.1} parent=1 // pred_fallthru
      _
    // Predicated region
    $region26: #{tpu_custom_call.1} parent=1 // pred_check
      _
    $region27: #{tpu_custom_call.1} parent=1 // pred_check_branch
      %709 = sbr.rel (0) target = $region29
    $region28: #{tpu_custom_call.1} parent=1 // pred_region
      _
    $region29: #{tpu_custom_call.1} parent=1 // pred_fallthru
      _
    // Predicated region
    $region30: #{tpu_custom_call.1} parent=1 // pred_check
      _
    $region31: #{tpu_custom_call.1} parent=1 // pred_check_branch
      %711 = sbr.rel (0) target = $region33
    $region32: #{tpu_custom_call.1} parent=1 // pred_region
      %712 = dma.done [#allocation5], 16
    $region33: #{tpu_custom_call.1} parent=1 // pred_fallthru
      _
    %713 = vsyncpa [#allocation4], 1
    %714 = vsyncpa [#allocation5], 1

</llo_original>
